<compile_context>
chip_gen: v7x
topology: tpu7x:2x2x1
jax: 0.10.0
libtpu: 0.0.40
codegen_flags: <defaults>
</compile_context>

<pallas_src>
import functools
import math

import jax
import jax.numpy as jnp
from jax.experimental import pallas as pl
from jax.experimental.pallas import tpu as pltpu


# --------------------------------------------------------------------------- helpers
def _round_up(a, b):
    return (a + b - 1) // b * b


def _full_spec(shape):
    nd = len(shape)
    return pl.BlockSpec(shape, lambda i, _nd=nd: (0,) * _nd)


def _mm(a, b):
    return jnp.dot(a, b, preferred_element_type=jnp.float32)


def _elu(y):
    return jnp.where(y > 0, y, jnp.exp(jnp.minimum(y, 0.0)) - 1.0)


def _l2n(t):
    # F.normalize(p=2, dim=-1) with eps=1e-12, via a single rsqrt
    return t * jax.lax.rsqrt(jnp.maximum(jnp.sum(t * t, axis=1, keepdims=True), 1e-24))


def _vmem_limit_bytes():
    # ~75% of physical VMEM, clamped to [32 MiB, 100 MiB]; safe fallback if query fails.
    try:
        cap = pltpu.get_tpu_info().vmem_capacity_bytes
        return int(min(max(cap * 3 // 4, 32 * 2**20), 100 * 2**20))
    except Exception:
        return 48 * 2**20


# --------------------------------------------------------------------------- kernels
def _encoder_kernel(x_ref, img_ref, cnt_ref, tok_ref,
                    e1w_ref, e1b_ref, e2w_ref, e2b_ref,
                    gc1w_ref, imgw_ref, imgb_ref,
                    slab_ref, sup_ref, *, pad_w):
    """Per row tile: mask tokens, folded-BN encoder, gc1 support, image head."""
    xm = x_ref[...] + cnt_ref[...] * tok_ref[...]            # count * enc_mask_token
    h1 = _elu(_mm(xm, e1w_ref[...]) + e1b_ref[...])           # Linear+BN(eval)+ELU folded
    fx = _elu(_mm(h1, e2w_ref[...]) + e2b_ref[...])
    sup_ref[...] = _mm(fx, gc1w_ref[...]).astype(sup_ref.dtype)   # bf16 operand for adj@sup
    img_emb = _mm(img_ref[...], imgw_ref[...]) + imgb_ref[...]
    pieces = [xm, fx, img_emb]
    if pad_w:
        pieces.append(jnp.zeros((xm.shape[0], pad_w), jnp.float32))
    slab_ref[...] = jnp.concatenate(pieces, axis=1)


def _gcn_hop1_kernel(a1_ref, a2_ref, sup_ref, gc23_ref, ms1_ref, ms2_ref):
    """Per adj row tile: hidden = relu(adj@sup1); fused second-hop RHS hidden@[gc2|gc3]."""
    sup = sup_ref[...]
    h1 = jnp.maximum(_mm(a1_ref[...], sup), 0.0)
    h2 = jnp.maximum(_mm(a2_ref[...], sup), 0.0)
    ms1_ref[...] = _mm(h1, gc23_ref[...]).astype(ms1_ref.dtype)
    ms2_ref[...] = _mm(h2, gc23_ref[...]).astype(ms2_ref.dtype)


def _gcn_hop2_kernel(a1_ref, a2_ref, ms1_ref, ms2_ref, fx_ref,
                     wo_ref, uo_ref, rnaw_ref, rnab_ref, decw_ref,
                     clut_ref, c2_ref,
                     slab_ref, dsup_ref, *, g2, alpha, pad_w):
    """Per adj row tile: mu/logvar, cross-attention, z, rna_emb, DEC q, decoder support."""
    mlv1 = _mm(a1_ref[...], ms1_ref[...])                     # (T, 2*G2) = [mu1 | logvar1]
    mlv2 = _mm(a2_ref[...], ms2_ref[...])
    mu1, lv1 = mlv1[:, :g2], mlv1[:, g2:]
    mu2, lv2 = mlv2[:, :g2], mlv2[:, g2:]

    # reparameterize() in eval mode -> mu; attention is row-wise (no (2N,D) stack needed)
    s1 = _mm(jnp.tanh(_mm(mu1, wo_ref[...])), uo_ref[...]) + 1e-6
    s2 = _mm(jnp.tanh(_mm(mu2, wo_ref[...])), uo_ref[...]) + 1e-6
    m = jnp.maximum(s1, s2)
    a1 = jnp.exp(s1 - m)
    a2 = jnp.exp(s2 - m)
    inv = 1.0 / (a1 + a2)                                     # exact softmax denom (parity)
    gnn_z = (a1 * inv) * mu1 + (a2 * inv) * mu2

    z = jnp.concatenate([fx_ref[...], gnn_z], axis=1)         # (T, F2+G2)
    rna = _mm(z, rnaw_ref[...]) + rnab_ref[...]
    dsup_ref[...] = _mm(rna, decw_ref[...]).astype(dsup_ref.dtype)   # decoder support (bf16)

    # DEC q: ||z||^2 - 2 z@c^T + ||c||^2 (cluster norms precomputed in wrapper)
    z2 = jnp.sum(z * z, axis=1, keepdims=True)
    zc = _mm(z, clut_ref[...])
    d2 = jnp.maximum(z2 - 2.0 * zc + c2_ref[...], 0.0)
    q = 1.0 / (1.0 + d2 / alpha)
    expo = (alpha + 1.0) / 2.0
    if expo != 1.0:
        q = q ** expo
    q = q / jnp.sum(q, axis=1, keepdims=True)

    pieces = [mu1, lv1, mu2, lv2, z, rna, q]
    if pad_w:
        pieces.append(jnp.zeros((z.shape[0], pad_w), jnp.float32))
    slab_ref[...] = jnp.concatenate(pieces, axis=1)


def _decoder_kernel(a1_ref, a2_ref, dsup_ref, xm_ref, sel_ref, slab_ref, *, pad_w):
    """Per adj row tile: de_feat1/2 = adj@dec_sup and per-row SCE-loss contributions."""
    dsup = dsup_ref[...]
    de1 = _mm(a1_ref[...], dsup)
    de2 = _mm(a2_ref[...], dsup)
    xn = _l2n(xm_ref[...])
    t1 = 1.0 - jnp.sum(_l2n(de1) * xn, axis=1, keepdims=True)
    t2 = 1.0 - jnp.sum(_l2n(de2) * xn, axis=1, keepdims=True)
    lrow = sel_ref[...] * (t1 * t1 * t1 + t2 * t2 * t2)       # pow(3) unrolled (keeps sign)
    pieces = [de1, de2, lrow]
    if pad_w:
        pieces.append(jnp.zeros((de1.shape[0], pad_w), jnp.float32))
    slab_ref[...] = jnp.concatenate(pieces, axis=1)


# --------------------------------------------------------------------------- params
def init_params(key, input_dim, image_feature, cl_emb_dim=32, feat_hidden1=64,
                feat_hidden2=16, gcn_hidden1=64, gcn_hidden2=16, dec_cluster_n=10):
    latent_dim = gcn_hidden2 + feat_hidden2
    ks = list(jax.random.split(key, 12))

    def xavier_uniform(k, shape):
        bound = math.sqrt(6.0 / (shape[0] + shape[1]))
        return jax.random.uniform(k, shape, jnp.float32, -bound, bound)

    def xavier_normal(k, shape):
        std = math.sqrt(2.0 / (shape[0] + shape[1]))
        return std * jax.random.normal(k, shape, jnp.float32)

    def bn(features):
        return (jnp.ones((1, features), jnp.float32),   # gamma
                jnp.zeros((1, features), jnp.float32),  # beta
                jnp.zeros((1, features), jnp.float32),  # running_mean
                jnp.ones((1, features), jnp.float32))   # running_var

    p = {}
    p['enc1_w'] = xavier_uniform(ks[0], (input_dim, feat_hidden1))
    p['enc1_b'] = jnp.zeros((1, feat_hidden1), jnp.float32)
    p['enc1_g'], p['enc1_beta'], p['enc1_mean'], p['enc1_var'] = bn(feat_hidden1)
    p['enc2_w'] = xavier_uniform(ks[1], (feat_hidden1, feat_hidden2))
    p['enc2_b'] = jnp.zeros((1, feat_hidden2), jnp.float32)
    p['enc2_g'], p['enc2_beta'], p['enc2_mean'], p['enc2_var'] = bn(feat_hidden2)

    p['gc1_w'] = xavier_uniform(ks[2], (feat_hidden2, gcn_hidden1))
    p['gc2_w'] = xavier_uniform(ks[3], (gcn_hidden1, gcn_hidden2))
    p['gc3_w'] = xavier_uniform(ks[4], (gcn_hidden1, gcn_hidden2))
    p['dec_w'] = xavier_uniform(ks[5], (latent_dim, input_dim))

    p['w_omega'] = xavier_uniform(ks[6], (gcn_hidden2, gcn_hidden2))
    p['u_omega'] = xavier_uniform(ks[7], (gcn_hidden2, 1))

    p['fc_rna_w'] = xavier_uniform(ks[8], (latent_dim, cl_emb_dim))
    p['fc_rna_b'] = jnp.zeros((1, cl_emb_dim), jnp.float32)
    p['fc_image_w'] = xavier_uniform(ks[9], (image_feature, cl_emb_dim))
    p['fc_image_b'] = jnp.zeros((1, cl_emb_dim), jnp.float32)

    p['cluster'] = xavier_normal(ks[10], (dec_cluster_n, latent_dim))
    p['enc_mask_token'] = jnp.zeros((1, input_dim), jnp.float32)
    return p


# --------------------------------------------------------------------------- forward
def sedr_forward(p, x, image_feature, adj1, adj2, mask_key,
                 mask_rate=0.8, alpha=1.0, tile_n=256):
    f32, bf16 = jnp.float32, jnp.bfloat16
    N, D = x.shape
    F1 = p['enc1_w'].shape[1]
    F2 = p['enc2_w'].shape[1]
    G1 = p['gc1_w'].shape[1]
    G2 = p['gc2_w'].shape[1]
    CL = p['fc_rna_w'].shape[1]
    K = p['cluster'].shape[0]
    L = F2 + G2
    img_flat = image_feature.reshape(N, -1).astype(f32)       # torch.flatten(start_dim=1)
    IMG = img_flat.shape[1]
    num_mask = int(mask_rate * N)
    # Same implicit constraint as the PyTorch module (decoder weight applied to rna_emb).
    assert p['dec_w'].shape[0] == CL

    # --- row tiling over N; tiles are multiples of 16 (bf16 sublane packing) ---
    tile = min(_round_up(tile_n, 16), _round_up(N, 16))
    Np = _round_up(N, tile)
    grid = (Np // tile,)

    # --- masking: fold both random masks into dense count/select columns -------------
    # TODO(synk): torch.randperm replaced by a deterministic jax.random.permutation.
    k1, k2 = jax.random.split(mask_key)
    mask1 = jax.random.permutation(k1, N)[:num_mask]
    mask2 = jax.random.permutation(k2, N)[:num_mask]          # the SCE loss uses the 2nd mask
    count = jnp.zeros((N, 1), f32).at[mask1, 0].add(1.0).at[mask2, 0].add(1.0)
    sel = jnp.zeros((N, 1), f32).at[mask2, 0].set(1.0)

    def pad_rows(a):
        return jnp.pad(a.astype(f32), ((0, Np - N), (0, 0)))

    x_p = pad_rows(x)
    img_p = pad_rows(img_flat)
    cnt_p = pad_rows(count)
    sel_p = pad_rows(sel)
    # adjacencies: zero-padded and cast to bf16 once (all three streaming passes read bf16)
    adj1_p = jnp.pad(adj1.astype(f32), ((0, Np - N), (0, Np - N))).astype(bf16)
    adj2_p = jnp.pad(adj2.astype(f32), ((0, Np - N), (0, Np - N))).astype(bf16)

    # --- fold eval-mode BatchNorm (eps=1e-3) into the encoder Linear weights ----------
    def fold_bn(w, b, g, beta, mean, var, eps=1e-3):
        s = g * jax.lax.rsqrt(var + eps)
        return (w * s).astype(f32), (b * s + beta - mean * s).astype(f32)

    e1w, e1b = fold_bn(p['enc1_w'], p['enc1_b'], p['enc1_g'], p['enc1_beta'],
                       p['enc1_mean'], p['enc1_var'])
    e2w, e2b = fold_bn(p['enc2_w'], p['enc2_b'], p['enc2_g'], p['enc2_beta'],
                       p['enc2_mean'], p['enc2_var'])
    gc23 = jnp.concatenate([p['gc2_w'], p['gc3_w']], axis=1).astype(f32)   # fused RHS
    clu_t = p['cluster'].T.astype(f32)                                     # (L, K)
    c2 = jnp.sum(p['cluster'] * p['cluster'], axis=1, keepdims=True).T.astype(f32)  # (1, K)

    def row_spec(w):
        return pl.BlockSpec((tile, w), lambda i: (i, 0))

    cp = pltpu.CompilerParams(dimension_semantics=("parallel",),
                              vmem_limit_bytes=_vmem_limit_bytes())

    # --------------------------- pass 1: encoder + gc1 support + image head ----------
    slab1_w = D + F2 + CL
    slab1_pw = _round_up(slab1_w, 128)
    slab1, sup1 = pl.pallas_call(
        functools.partial(_encoder_kernel, pad_w=slab1_pw - slab1_w),
        grid=grid,
        in_specs=[row_spec(D), row_spec(IMG), row_spec(1), _full_spec((1, D)),
                  _full_spec((D, F1)), _full_spec((1, F1)),
                  _full_spec((F1, F2)), _full_spec((1, F2)),
                  _full_spec((F2, G1)),
                  _full_spec((IMG, CL)), _full_spec((1, CL))],
        out_specs=(row_spec(slab1_pw), row_spec(G1)),
        out_shape=(jax.ShapeDtypeStruct((Np, slab1_pw), f32),
                   jax.ShapeDtypeStruct((Np, G1), bf16)),
        compiler_params=cp,
    )(x_p, img_p, cnt_p, p['enc_mask_token'].astype(f32),
      e1w, e1b, e2w, e2b, p['gc1_w'].astype(f32),
      p['fc_image_w'].astype(f32), p['fc_image_b'].astype(f32))

    # --------------------------- pass 2: hidden + fused [gc2|gc3] support ------------
    cost2 = pl.CostEstimate(
        flops=int(2 * 2 * Np * Np * G1 + 2 * 2 * Np * G1 * 2 * G2),
        transcendentals=0,
        bytes_accessed=int(2 * Np * Np * 2 + grid[0] * Np * G1 * 2 + 2 * Np * 2 * G2 * 2))
    ms1, ms2 = pl.pallas_call(
        _gcn_hop1_kernel,
        grid=grid,
        in_specs=[row_spec(Np), row_spec(Np),
                  _full_spec((Np, G1)), _full_spec((G1, 2 * G2))],
        out_specs=(row_spec(2 * G2), row_spec(2 * G2)),
        out_shape=(jax.ShapeDtypeStruct((Np, 2 * G2), bf16),
                   jax.ShapeDtypeStruct((Np, 2 * G2), bf16)),
        compiler_params=cp,
        cost_estimate=cost2,
    )(adj1_p, adj2_p, sup1, gc23)

    # --------------------------- pass 3: mu/logvar + attention + z/rna/q + dec_sup ---
    feat_x_p = slab1[:, D:D + F2]
    slab3_w = 4 * G2 + L + CL + K
    slab3_pw = _round_up(slab3_w, 128)
    cost3 = pl.CostEstimate(
        flops=int(2 * 2 * Np * Np * 2 * G2 + 2 * Np * L * (CL + K) + 2 * Np * CL * D),
        transcendentals=int(4 * Np),
        bytes_accessed=int(2 * Np * Np * 2 + 2 * grid[0] * Np * 2 * G2 * 2
                           + Np * (slab3_pw * 4 + D * 2)))
    slab3, dsup = pl.pallas_call(
        functools.partial(_gcn_hop2_kernel, g2=G2, alpha=float(alpha),
                          pad_w=slab3_pw - slab3_w),
        grid=grid,
        in_specs=[row_spec(Np), row_spec(Np),
                  _full_spec((Np, 2 * G2)), _full_spec((Np, 2 * G2)),
                  row_spec(F2),
                  _full_spec((G2, G2)), _full_spec((G2, 1)),
                  _full_spec((L, CL)), _full_spec((1, CL)),
                  _full_spec((CL, D)),
                  _full_spec((L, K)), _full_spec((1, K))],
        out_specs=(row_spec(slab3_pw), row_spec(D)),
        out_shape=(jax.ShapeDtypeStruct((Np, slab3_pw), f32),
                   jax.ShapeDtypeStruct((Np, D), bf16)),
        compiler_params=cp,
        cost_estimate=cost3,
    )(adj1_p, adj2_p, ms1, ms2, feat_x_p,
      p['w_omega'].astype(f32), p['u_omega'].astype(f32),
      p['fc_rna_w'].astype(f32), p['fc_rna_b'].astype(f32),
      p['dec_w'].astype(f32), clu_t, c2)

    # --------------------------- pass 4: de_feat + SCE loss contributions ------------
    xm_p = slab1[:, :D]
    slab4_w = 2 * D + 1
    slab4_pw = _round_up(slab4_w, 128)
    cost4 = pl.CostEstimate(
        flops=int(2 * 2 * Np * Np * D),
        transcendentals=int(3 * Np),
        bytes_accessed=int(2 * Np * Np * 2 + grid[0] * Np * D * 2 + Np * slab4_pw * 4))
    slab4 = pl.pallas_call(
        functools.partial(_decoder_kernel, pad_w=slab4_pw - slab4_w),
        grid=grid,
        in_specs=[row_spec(Np), row_spec(Np), _full_spec((Np, D)),
                  row_spec(D), row_spec(1)],
        out_specs=row_spec(slab4_pw),
        out_shape=jax.ShapeDtypeStruct((Np, slab4_pw), f32),
        compiler_params=cp,
        cost_estimate=cost4,
    )(adj1_p, adj2_p, dsup, xm_p, sel_p)

    # --------------------------- unpack slabs ------------------------------------------
    mu1 = slab3[:N, 0:G2]
    logvar1 = slab3[:N, G2:2 * G2]
    mu2 = slab3[:N, 2 * G2:3 * G2]
    logvar2 = slab3[:N, 3 * G2:4 * G2]
    z = slab3[:N, 4 * G2:4 * G2 + L]
    rna_emb = slab3[:N, 4 * G2 + L:4 * G2 + L + CL]
    q = slab3[:N, 4 * G2 + L + CL:4 * G2 + L + CL + K]
    feat_x = slab1[:N, D:D + F2]
    image_emb = slab1[:N, D + F2:D + F2 + CL]
    gnn_z = z[:, F2:]
    de_feat1 = slab4[:N, :D]
    de_feat2 = slab4[:N, D:2 * D]
    loss = jnp.sum(slab4[:N, 2 * D]) / max(num_mask, 1)      # loss1 + loss2 (means over mask)

    return (z, mu1, logvar1, mu2, logvar2, de_feat1, de_feat2, q,
            feat_x, gnn_z, loss, rna_emb, image_emb)


# --------------------------------------------------------------------------- main
if __name__ == "__main__":
    N = 32            # number of nodes / spots (2 row tiles of 16 -> exercises the grid)
    INPUT_DIM = 32    # gene feature dim
    IMAGE_DIM = 24    # image feature dim

    key = jax.random.PRNGKey(0)
    kp, kx, ki, ka1, ka2, km = jax.random.split(key, 6)

    params = init_params(kp, INPUT_DIM, IMAGE_DIM)

    x = jax.random.normal(kx, (N, INPUT_DIM), jnp.float32)
    image_feature = jax.random.normal(ki, (N, IMAGE_DIM), jnp.float32)

    def make_adj(k):
        a = (jax.random.uniform(k, (N, N)) < 0.25).astype(jnp.float32)
        a = jnp.minimum(a + a.T + jnp.eye(N, dtype=jnp.float32), 1.0)
        return a / jnp.sum(a, axis=1, keepdims=True)   # row-normalized dense adjacency

    adj1 = make_adj(ka1)
    adj2 = make_adj(ka2)

    outs = sedr_forward(params, x, image_feature, adj1, adj2, km, tile_n=16)
    outs = jax.tree_util.tree_map(jax.block_until_ready, outs)

    (z, mu1, logvar1, mu2, logvar2, de1, de2, q, feat_x, gnn_z,
     loss, rna_emb, image_emb) = outs
    assert z.shape == (N, 32)
    assert mu1.shape == (N, 16) and logvar1.shape == (N, 16)
    assert mu2.shape == (N, 16) and logvar2.shape == (N, 16)
    assert de1.shape == (N, INPUT_DIM) and de2.shape == (N, INPUT_DIM)
    assert q.shape == (N, 10)
    assert feat_x.shape == (N, 16) and gnn_z.shape == (N, 16)
    assert rna_emb.shape == (N, 32) and image_emb.shape == (N, 32)
    assert bool(jnp.all(jnp.isfinite(q)))
    assert bool(jnp.allclose(jnp.sum(q, axis=1), 1.0, atol=1e-3))
    assert bool(jnp.isfinite(loss))
    print("KERNEL_OK")
</pallas_src>

<mosaic_0001>
module attributes {stable_mosaic.version = 11 : i64} {
  func.func @_encoder_kernel(%arg0: i32, %arg1: memref<16x32xf32, #tpu.memory_space<vmem>>, %arg2: memref<16x24xf32, #tpu.memory_space<vmem>>, %arg3: memref<16x1xf32, #tpu.memory_space<vmem>>, %arg4: memref<1x32xf32, #tpu.memory_space<vmem>>, %arg5: memref<32x64xf32, #tpu.memory_space<vmem>>, %arg6: memref<1x64xf32, #tpu.memory_space<vmem>>, %arg7: memref<64x16xf32, #tpu.memory_space<vmem>>, %arg8: memref<1x16xf32, #tpu.memory_space<vmem>>, %arg9: memref<16x64xf32, #tpu.memory_space<vmem>>, %arg10: memref<24x32xf32, #tpu.memory_space<vmem>>, %arg11: memref<1x32xf32, #tpu.memory_space<vmem>>, %arg12: memref<16x128xf32, #tpu.memory_space<vmem>>, %arg13: memref<16x64xbf16, #tpu.memory_space<vmem>>) attributes {dimension_semantics = [#tpu.dimension_semantics<parallel>], iteration_bounds = array<i64: 2>, scalar_prefetch = 0 : i64, scratch_operands = 0 : i64, tpu.core_type = #tpu.core_type<tc>, window_params = [{transform_indices = @transform_0, window_bounds = array<i64: 16, 32>}, {transform_indices = @transform_1, window_bounds = array<i64: 16, 24>}, {transform_indices = @transform_2, window_bounds = array<i64: 16, 1>}, {pipeline_mode = #tpu.pipeline_mode<synchronous>, transform_indices = @transform_3, window_bounds = array<i64: 1, 32>}, {pipeline_mode = #tpu.pipeline_mode<synchronous>, transform_indices = @transform_4, window_bounds = array<i64: 32, 64>}, {pipeline_mode = #tpu.pipeline_mode<synchronous>, transform_indices = @transform_5, window_bounds = array<i64: 1, 64>}, {pipeline_mode = #tpu.pipeline_mode<synchronous>, transform_indices = @transform_6, window_bounds = array<i64: 64, 16>}, {pipeline_mode = #tpu.pipeline_mode<synchronous>, transform_indices = @transform_7, window_bounds = array<i64: 1, 16>}, {pipeline_mode = #tpu.pipeline_mode<synchronous>, transform_indices = @transform_8, window_bounds = array<i64: 16, 64>}, {pipeline_mode = #tpu.pipeline_mode<synchronous>, transform_indices = @transform_9, window_bounds = array<i64: 24, 32>}, {pipeline_mode = #tpu.pipeline_mode<synchronous>, transform_indices = @transform_10, window_bounds = array<i64: 1, 32>}, {transform_indices = @transform_11, window_bounds = array<i64: 16, 128>}, {transform_indices = @transform_12, window_bounds = array<i64: 16, 64>}]} {
    %c0 = arith.constant 0 : index
    %c0_0 = arith.constant 0 : index
    %0 = vector.load %arg1[%c0, %c0_0] : memref<16x32xf32, #tpu.memory_space<vmem>>, vector<16x32xf32>
    %c0_1 = arith.constant 0 : index
    %c0_2 = arith.constant 0 : index
    %1 = vector.load %arg3[%c0_1, %c0_2] : memref<16x1xf32, #tpu.memory_space<vmem>>, vector<16x1xf32>
    %c0_3 = arith.constant 0 : index
    %c0_4 = arith.constant 0 : index
    %2 = vector.load %arg4[%c0_3, %c0_4] : memref<1x32xf32, #tpu.memory_space<vmem>>, vector<1x32xf32>
    %3 = vector.broadcast %1 : vector<16x1xf32> to vector<16x32xf32>
    %4 = vector.broadcast %2 : vector<1x32xf32> to vector<16x32xf32>
    %5 = arith.mulf %3, %4 : vector<16x32xf32>
    %6 = arith.addf %0, %5 : vector<16x32xf32>
    %c0_5 = arith.constant 0 : index
    %c0_6 = arith.constant 0 : index
    %7 = vector.load %arg5[%c0_5, %c0_6] : memref<32x64xf32, #tpu.memory_space<vmem>>, vector<32x64xf32>
    %cst = arith.constant dense<0.000000e+00> : vector<16x64xf32>
    %8 = tpu.matmul %6, %7, %cst {dimension_numbers = #tpu.dot_dimension_numbers<[1], [0], [0], [1], [0, 0, 1, 1], [], []>} : vector<16x32xf32>, vector<32x64xf32>, vector<16x64xf32> -> vector<16x64xf32>
    %c0_7 = arith.constant 0 : index
    %c0_8 = arith.constant 0 : index
    %9 = vector.load %arg6[%c0_7, %c0_8] : memref<1x64xf32, #tpu.memory_space<vmem>>, vector<1x64xf32>
    %10 = vector.broadcast %9 : vector<1x64xf32> to vector<16x64xf32>
    %11 = arith.addf %8, %10 : vector<16x64xf32>
    %cst_9 = arith.constant 0.000000e+00 : f32
    %12 = vector.broadcast %cst_9 : f32 to vector<16x64xf32>
    %13 = arith.cmpf ogt, %11, %12 : vector<16x64xf32>
    %cst_10 = arith.constant 0.000000e+00 : f32
    %14 = vector.broadcast %cst_10 : f32 to vector<16x64xf32>
    %15 = arith.minimumf %11, %14 : vector<16x64xf32>
    %16 = math.exp %15 : vector<16x64xf32>
    %cst_11 = arith.constant 1.000000e+00 : f32
    %17 = vector.broadcast %cst_11 : f32 to vector<16x64xf32>
    %18 = arith.subf %16, %17 : vector<16x64xf32>
    %19 = arith.select %13, %11, %18 : vector<16x64xi1>, vector<16x64xf32>
    %c0_12 = arith.constant 0 : index
    %c0_13 = arith.constant 0 : index
    %20 = vector.load %arg7[%c0_12, %c0_13] : memref<64x16xf32, #tpu.memory_space<vmem>>, vector<64x16xf32>
    %cst_14 = arith.constant dense<0.000000e+00> : vector<16x16xf32>
    %21 = tpu.matmul %19, %20, %cst_14 {dimension_numbers = #tpu.dot_dimension_numbers<[1], [0], [0], [1], [0, 0, 1, 1], [], []>} : vector<16x64xf32>, vector<64x16xf32>, vector<16x16xf32> -> vector<16x16xf32>
    %c0_15 = arith.constant 0 : index
    %c0_16 = arith.constant 0 : index
    %22 = vector.load %arg8[%c0_15, %c0_16] : memref<1x16xf32, #tpu.memory_space<vmem>>, vector<1x16xf32>
    %23 = vector.broadcast %22 : vector<1x16xf32> to vector<16x16xf32>
    %24 = arith.addf %21, %23 : vector<16x16xf32>
    %cst_17 = arith.constant 0.000000e+00 : f32
    %25 = vector.broadcast %cst_17 : f32 to vector<16x16xf32>
    %26 = arith.cmpf ogt, %24, %25 : vector<16x16xf32>
    %cst_18 = arith.constant 0.000000e+00 : f32
    %27 = vector.broadcast %cst_18 : f32 to vector<16x16xf32>
    %28 = arith.minimumf %24, %27 : vector<16x16xf32>
    %29 = math.exp %28 : vector<16x16xf32>
    %cst_19 = arith.constant 1.000000e+00 : f32
    %30 = vector.broadcast %cst_19 : f32 to vector<16x16xf32>
    %31 = arith.subf %29, %30 : vector<16x16xf32>
    %32 = arith.select %26, %24, %31 : vector<16x16xi1>, vector<16x16xf32>
    %c0_20 = arith.constant 0 : index
    %c0_21 = arith.constant 0 : index
    %33 = vector.load %arg9[%c0_20, %c0_21] : memref<16x64xf32, #tpu.memory_space<vmem>>, vector<16x64xf32>
    %cst_22 = arith.constant dense<0.000000e+00> : vector<16x64xf32>
    %34 = tpu.matmul %32, %33, %cst_22 {dimension_numbers = #tpu.dot_dimension_numbers<[1], [0], [0], [1], [0, 0, 1, 1], [], []>} : vector<16x16xf32>, vector<16x64xf32>, vector<16x64xf32> -> vector<16x64xf32>
    %35 = arith.truncf %34 : vector<16x64xf32> to vector<16x64xbf16>
    %c0_23 = arith.constant 0 : index
    %c0_24 = arith.constant 0 : index
    %36 = vector.load %arg13[%c0_23, %c0_24] : memref<16x64xbf16, #tpu.memory_space<vmem>>, vector<16x64xbf16>
    tpu.vector_store %arg13[%c0_23, %c0_24], %35 {strides = array<i32>} : memref<16x64xbf16, #tpu.memory_space<vmem>>, vector<16x64xbf16>,
    %c0_25 = arith.constant 0 : index
    %c0_26 = arith.constant 0 : index
    %37 = vector.load %arg2[%c0_25, %c0_26] : memref<16x24xf32, #tpu.memory_space<vmem>>, vector<16x24xf32>
    %c0_27 = arith.constant 0 : index
    %c0_28 = arith.constant 0 : index
    %38 = vector.load %arg10[%c0_27, %c0_28] : memref<24x32xf32, #tpu.memory_space<vmem>>, vector<24x32xf32>
    %cst_29 = arith.constant dense<0.000000e+00> : vector<16x32xf32>
    %39 = tpu.matmul %37, %38, %cst_29 {dimension_numbers = #tpu.dot_dimension_numbers<[1], [0], [0], [1], [0, 0, 1, 1], [], []>} : vector<16x24xf32>, vector<24x32xf32>, vector<16x32xf32> -> vector<16x32xf32>
    %c0_30 = arith.constant 0 : index
    %c0_31 = arith.constant 0 : index
    %40 = vector.load %arg11[%c0_30, %c0_31] : memref<1x32xf32, #tpu.memory_space<vmem>>, vector<1x32xf32>
    %41 = vector.broadcast %40 : vector<1x32xf32> to vector<16x32xf32>
    %42 = arith.addf %39, %41 : vector<16x32xf32>
    %cst_32 = arith.constant 0.000000e+00 : f32
    %43 = vector.broadcast %cst_32 : f32 to vector<16x48xf32>
    %44 = tpu.concatenate %6, %32, %42, %43 in 1 : vector<16x32xf32>, vector<16x16xf32>, vector<16x32xf32>, vector<16x48xf32> -> vector<16x128xf32>
    %c0_33 = arith.constant 0 : index
    %c0_34 = arith.constant 0 : index
    %45 = vector.load %arg12[%c0_33, %c0_34] : memref<16x128xf32, #tpu.memory_space<vmem>>, vector<16x128xf32>
    tpu.vector_store %arg12[%c0_33, %c0_34], %44 {strides = array<i32>} : memref<16x128xf32, #tpu.memory_space<vmem>>, vector<16x128xf32>,
    return
  }
  func.func @transform_0(%arg0: i32) -> (i32, i32) {
    %c0_i32 = arith.constant 0 : i32
    %c0_i32_0 = arith.constant 0 : i32
    return %arg0, %c0_i32 : i32, i32
  }
  func.func @transform_1(%arg0: i32) -> (i32, i32) {
    %c0_i32 = arith.constant 0 : i32
    %c0_i32_0 = arith.constant 0 : i32
    return %arg0, %c0_i32 : i32, i32
  }
  func.func @transform_2(%arg0: i32) -> (i32, i32) {
    %c0_i32 = arith.constant 0 : i32
    %c0_i32_0 = arith.constant 0 : i32
    return %arg0, %c0_i32 : i32, i32
  }
  func.func @transform_3(%arg0: i32) -> (i32, i32) {
    %c0_i32 = arith.constant 0 : i32
    %c0_i32_0 = arith.constant 0 : i32
    %c0_i32_1 = arith.constant 0 : i32
    return %c0_i32, %c0_i32_0 : i32, i32
  }
  func.func @transform_4(%arg0: i32) -> (i32, i32) {
    %c0_i32 = arith.constant 0 : i32
    %c0_i32_0 = arith.constant 0 : i32
    %c0_i32_1 = arith.constant 0 : i32
    return %c0_i32, %c0_i32_0 : i32, i32
  }
  func.func @transform_5(%arg0: i32) -> (i32, i32) {
    %c0_i32 = arith.constant 0 : i32
    %c0_i32_0 = arith.constant 0 : i32
    %c0_i32_1 = arith.constant 0 : i32
    return %c0_i32, %c0_i32_0 : i32, i32
  }
  func.func @transform_6(%arg0: i32) -> (i32, i32) {
    %c0_i32 = arith.constant 0 : i32
    %c0_i32_0 = arith.constant 0 : i32
    %c0_i32_1 = arith.constant 0 : i32
    return %c0_i32, %c0_i32_0 : i32, i32
  }
  func.func @transform_7(%arg0: i32) -> (i32, i32) {
    %c0_i32 = arith.constant 0 : i32
    %c0_i32_0 = arith.constant 0 : i32
    %c0_i32_1 = arith.constant 0 : i32
    return %c0_i32, %c0_i32_0 : i32, i32
  }
  func.func @transform_8(%arg0: i32) -> (i32, i32) {
    %c0_i32 = arith.constant 0 : i32
    %c0_i32_0 = arith.constant 0 : i32
    %c0_i32_1 = arith.constant 0 : i32
    return %c0_i32, %c0_i32_0 : i32, i32
  }
  func.func @transform_9(%arg0: i32) -> (i32, i32) {
    %c0_i32 = arith.constant 0 : i32
    %c0_i32_0 = arith.constant 0 : i32
    %c0_i32_1 = arith.constant 0 : i32
    return %c0_i32, %c0_i32_0 : i32, i32
  }
  func.func @transform_10(%arg0: i32) -> (i32, i32) {
    %c0_i32 = arith.constant 0 : i32
    %c0_i32_0 = arith.constant 0 : i32
    %c0_i32_1 = arith.constant 0 : i32
    return %c0_i32, %c0_i32_0 : i32, i32
  }
  func.func @transform_11(%arg0: i32) -> (i32, i32) {
    %c0_i32 = arith.constant 0 : i32
    %c0_i32_0 = arith.constant 0 : i32
    return %arg0, %c0_i32 : i32, i32
  }
  func.func @transform_12(%arg0: i32) -> (i32, i32) {
    %c0_i32 = arith.constant 0 : i32
    %c0_i32_0 = arith.constant 0 : i32
    return %arg0, %c0_i32 : i32, i32
  }
}

</mosaic_0001>

<llo_original>
// kernel: tpu_custom_call.1
$region0: #{tpu_custom_call.1}
  #allocation0 [shape = 'u32[]', space=smem, size = 0x4, offset = 0x4, fixed_abs, tag = 'smem constant byte address 0x4 - core index']
  #allocation1 [shape = 'u32[144,128]{1,0:T(1,128)}', space=vmem, size = 0x12000, scoped, tag = 'internal scratch']
  %s0 = inlined_call_operand.vmem [shape: f32[32,32], index: 0, kind: input, shape index: {}]
  %s1 = inlined_call_operand.vmem [shape: f32[32,24], index: 1, kind: input, shape index: {}]
  %s2 = inlined_call_operand.vmem [shape: f32[32,1], index: 2, kind: input, shape index: {}]
  %s3 = inlined_call_operand.vmem [shape: f32[1,32], index: 3, kind: input, shape index: {}]
  %s4 = inlined_call_operand.vmem [shape: f32[32,64], index: 4, kind: input, shape index: {}]
  %s5 = inlined_call_operand.vmem [shape: f32[1,64], index: 5, kind: input, shape index: {}]
  %s6 = inlined_call_operand.vmem [shape: f32[64,16], index: 6, kind: input, shape index: {}]
  %s7 = inlined_call_operand.vmem [shape: f32[1,16], index: 7, kind: input, shape index: {}]
  %s8 = inlined_call_operand.vmem [shape: f32[16,64], index: 8, kind: input, shape index: {}]
  %s9 = inlined_call_operand.vmem [shape: f32[24,32], index: 9, kind: input, shape index: {}]
  %s10 = inlined_call_operand.vmem [shape: f32[1,32], index: 10, kind: input, shape index: {}]
  %s11 = inlined_call_operand.hbm [shape: f32[32,128], index: 11, kind: output, shape index: {0}]
  %s12 = inlined_call_operand.hbm [shape: bf16[32,64], index: 12, kind: output, shape index: {1}]
  %13 = xla_tuple %s11, %s12
  %s14 = sld [smem:[#allocation0]]
  $region85: #{tpu_custom_call.1} parent=0
    _
  %s16 = ssub.s32 1, %s14
  %s17 = scalar_select 0, %s16, %s14
  $region1: #{tpu_custom_call.1} parent=0
    #allocation2 [shape = 'u8[16384]{0}', space=vmem, size = 0x4000, scoped, tag = 'output window, operand 0']
    #allocation3 [shape = 's32[2]{0}', space=sflag, size = 0x8, scoped, tag = 'scoped memory for tpu_custom_call.1']
    #allocation4 [shape = 'u8[8192]{0}', space=vmem, size = 0x2000, scoped, tag = 'output window, operand 1']
    #allocation5 [shape = 's32[2]{0}', space=sflag, size = 0x8, scoped, tag = 'scoped memory for tpu_custom_call.1']
    %18 = vsyncpa [#allocation3], 0
    %s19 = scalar_lea.sflag [#allocation3], 1
    %20 = vsyncpa %s19, 0
    %21 = vsyncpa [#allocation5], 0
    %s22 = scalar_lea.sflag [#allocation5], 1
    %23 = vsyncpa %s22, 0
    loop: start=0, step=1, limit=4
    $region2: #{tpu_custom_call.1} parent=1 // loop_pre_header
      _
    $region3: #{tpu_custom_call.1} parent=1 // loop_header
      %s25 = sphi 0, %s29
      %p26 = scmp.ge.s32.totalorder %s25, 4
      %s35 = sphi 0, %s37
      %s38 = sphi 0, %s35
      %s39 = sphi 0, %s38
      %s55 = sphi 0, %s39
      %s61 = sphi 0, %s63
      %s64 = sphi 0, %s61
      %s65 = sphi 0, %s64
      %s81 = sphi 0, %s65
      %s87 = sphi 0, %s89
      %s90 = sphi 0, %s87
      %s91 = sphi 0, %s90
      %s107 = sphi 0, %s91
      %s111 = sphi 0, %s111
      %s113 = sphi 0, %s111
      %s114 = sphi 0, %s113
      %s128 = sphi 0, %s114
      %s132 = sphi 0, %s132
      %s134 = sphi 0, %s132
      %s135 = sphi 0, %s134
      %s149 = sphi 0, %s135
      %s153 = sphi 0, %s153
      %s155 = sphi 0, %s153
      %s156 = sphi 0, %s155
      %s170 = sphi 0, %s156
      %s174 = sphi 0, %s174
      %s176 = sphi 0, %s174
      %s177 = sphi 0, %s176
      %s191 = sphi 0, %s177
      %s195 = sphi 0, %s195
      %s197 = sphi 0, %s195
      %s198 = sphi 0, %s197
      %s212 = sphi 0, %s198
      %s216 = sphi 0, %s216
      %s218 = sphi 0, %s216
      %s219 = sphi 0, %s218
      %s233 = sphi 0, %s219
      %s237 = sphi 0, %s237
      %s239 = sphi 0, %s237
      %s240 = sphi 0, %s239
      %s254 = sphi 0, %s240
      %s258 = sphi 0, %s258
      %s260 = sphi 0, %s258
      %s261 = sphi 0, %s260
      %s275 = sphi 0, %s261
      %s281 = sphi 0, %s283
      %s284 = sphi 0, %s281
      %s285 = sphi 0, %s284
      %s301 = sphi 0, %s285
      %s307 = sphi 0, %s309
      %s310 = sphi 0, %s307
      %s311 = sphi 0, %s310
      %s327 = sphi 0, %s311
    $region4: #{tpu_custom_call.1} parent=1 // loop_header_branch
      %28 = sbr.rel (%p26) target = $region8
    $region5: #{tpu_custom_call.1} parent=1 // loop_body
      %s30 = ssub.s32 %s25, 1
      %s31 = ssub.s32 %s25, 2
      %s32 = sadd.s32 %s25, 1
      %s33 = ssub.s32 %s25, %s32
      %p34 = scmp.eq.s32.totalorder %s33, 0
      %s36 = sadd.s32 %s35, 1
      %s37 = scalar_select %p34, %s35, %s36
      %p40 = pneg %p34
      %p41 = scmp.eq.s32.totalorder %s25, 1
      %p42 = por %p40, %p41
      %p43 = scmp.ne.s32.totalorder %s35, %s38
      %p44 = scmp.eq.s32.totalorder %s25, 0
      %p45 = por %p43, %p44
      %p46 = scmp.ne.s32.totalorder %s35, %s38
      %p47 = scmp.eq.s32.totalorder %s30, 1
      %p48 = por %p46, %p47
      %p49 = scmp.ne.s32.totalorder %s38, %s39
      %p50 = scmp.eq.s32.totalorder %s30, 0
      %p51 = por %p49, %p50
      %p52 = scmp.ne.s32.totalorder %s38, %s39
      %p53 = scmp.eq.s32.totalorder %s31, 1
      %p54 = por %p52, %p53
      %p56 = scmp.ne.s32.totalorder %s39, %s55
      %p57 = scmp.eq.s32.totalorder %s31, 0
      %p58 = por %p56, %p57
      %s59 = ssub.s32 %s25, %s32
      %p60 = scmp.eq.s32.totalorder %s59, 0
      %s62 = sadd.s32 %s61, 1
      %s63 = scalar_select %p60, %s61, %s62
      %p66 = pneg %p60
      %p67 = scmp.eq.s32.totalorder %s25, 1
      %p68 = por %p66, %p67
      %p69 = scmp.ne.s32.totalorder %s61, %s64
      %p70 = scmp.eq.s32.totalorder %s25, 0
      %p71 = por %p69, %p70
      %p72 = scmp.ne.s32.totalorder %s61, %s64
      %p73 = scmp.eq.s32.totalorder %s30, 1
      %p74 = por %p72, %p73
      %p75 = scmp.ne.s32.totalorder %s64, %s65
      %p76 = scmp.eq.s32.totalorder %s30, 0
      %p77 = por %p75, %p76
      %p78 = scmp.ne.s32.totalorder %s64, %s65
      %p79 = scmp.eq.s32.totalorder %s31, 1
      %p80 = por %p78, %p79
      %p82 = scmp.ne.s32.totalorder %s65, %s81
      %p83 = scmp.eq.s32.totalorder %s31, 0
      %p84 = por %p82, %p83
      %s85 = ssub.s32 %s25, %s32
      %p86 = scmp.eq.s32.totalorder %s85, 0
      %s88 = sadd.s32 %s87, 1
      %s89 = scalar_select %p86, %s87, %s88
      %p92 = pneg %p86
      %p93 = scmp.eq.s32.totalorder %s25, 1
      %p94 = por %p92, %p93
      %p95 = scmp.ne.s32.totalorder %s87, %s90
      %p96 = scmp.eq.s32.totalorder %s25, 0
      %p97 = por %p95, %p96
      %p98 = scmp.ne.s32.totalorder %s87, %s90
      %p99 = scmp.eq.s32.totalorder %s30, 1
      %p100 = por %p98, %p99
      %p101 = scmp.ne.s32.totalorder %s90, %s91
      %p102 = scmp.eq.s32.totalorder %s30, 0
      %p103 = por %p101, %p102
      %p104 = scmp.ne.s32.totalorder %s90, %s91
      %p105 = scmp.eq.s32.totalorder %s31, 1
      %p106 = por %p104, %p105
      %p108 = scmp.ne.s32.totalorder %s91, %s107
      %p109 = scmp.eq.s32.totalorder %s31, 0
      %p110 = por %p108, %p109
      %s112 = sadd.s32 %s111, 1
      %p115 = scmp.eq.s32.totalorder %s25, 1
      %p116 = scmp.ne.s32.totalorder %s111, %s113
      %p117 = scmp.eq.s32.totalorder %s25, 0
      %p118 = por %p116, %p117
      %p119 = scmp.ne.s32.totalorder %s111, %s113
      %p120 = scmp.eq.s32.totalorder %s30, 1
      %p121 = por %p119, %p120
      %p122 = scmp.ne.s32.totalorder %s113, %s114
      %p123 = scmp.eq.s32.totalorder %s30, 0
      %p124 = por %p122, %p123
      %p125 = scmp.ne.s32.totalorder %s113, %s114
      %p126 = scmp.eq.s32.totalorder %s31, 1
      %p127 = por %p125, %p126
      %p129 = scmp.ne.s32.totalorder %s114, %s128
      %p130 = scmp.eq.s32.totalorder %s31, 0
      %p131 = por %p129, %p130
      %s133 = sadd.s32 %s132, 1
      %p136 = scmp.eq.s32.totalorder %s25, 1
      %p137 = scmp.ne.s32.totalorder %s132, %s134
      %p138 = scmp.eq.s32.totalorder %s25, 0
      %p139 = por %p137, %p138
      %p140 = scmp.ne.s32.totalorder %s132, %s134
      %p141 = scmp.eq.s32.totalorder %s30, 1
      %p142 = por %p140, %p141
      %p143 = scmp.ne.s32.totalorder %s134, %s135
      %p144 = scmp.eq.s32.totalorder %s30, 0
      %p145 = por %p143, %p144
      %p146 = scmp.ne.s32.totalorder %s134, %s135
      %p147 = scmp.eq.s32.totalorder %s31, 1
      %p148 = por %p146, %p147
      %p150 = scmp.ne.s32.totalorder %s135, %s149
      %p151 = scmp.eq.s32.totalorder %s31, 0
      %p152 = por %p150, %p151
      %s154 = sadd.s32 %s153, 1
      %p157 = scmp.eq.s32.totalorder %s25, 1
      %p158 = scmp.ne.s32.totalorder %s153, %s155
      %p159 = scmp.eq.s32.totalorder %s25, 0
      %p160 = por %p158, %p159
      %p161 = scmp.ne.s32.totalorder %s153, %s155
      %p162 = scmp.eq.s32.totalorder %s30, 1
      %p163 = por %p161, %p162
      %p164 = scmp.ne.s32.totalorder %s155, %s156
      %p165 = scmp.eq.s32.totalorder %s30, 0
      %p166 = por %p164, %p165
      %p167 = scmp.ne.s32.totalorder %s155, %s156
      %p168 = scmp.eq.s32.totalorder %s31, 1
      %p169 = por %p167, %p168
      %p171 = scmp.ne.s32.totalorder %s156, %s170
      %p172 = scmp.eq.s32.totalorder %s31, 0
      %p173 = por %p171, %p172
      %s175 = sadd.s32 %s174, 1
      %p178 = scmp.eq.s32.totalorder %s25, 1
      %p179 = scmp.ne.s32.totalorder %s174, %s176
      %p180 = scmp.eq.s32.totalorder %s25, 0
      %p181 = por %p179, %p180
      %p182 = scmp.ne.s32.totalorder %s174, %s176
      %p183 = scmp.eq.s32.totalorder %s30, 1
      %p184 = por %p182, %p183
      %p185 = scmp.ne.s32.totalorder %s176, %s177
      %p186 = scmp.eq.s32.totalorder %s30, 0
      %p187 = por %p185, %p186
      %p188 = scmp.ne.s32.totalorder %s176, %s177
      %p189 = scmp.eq.s32.totalorder %s31, 1
      %p190 = por %p188, %p189
      %p192 = scmp.ne.s32.totalorder %s177, %s191
      %p193 = scmp.eq.s32.totalorder %s31, 0
      %p194 = por %p192, %p193
      %s196 = sadd.s32 %s195, 1
      %p199 = scmp.eq.s32.totalorder %s25, 1
      %p200 = scmp.ne.s32.totalorder %s195, %s197
      %p201 = scmp.eq.s32.totalorder %s25, 0
      %p202 = por %p200, %p201
      %p203 = scmp.ne.s32.totalorder %s195, %s197
      %p204 = scmp.eq.s32.totalorder %s30, 1
      %p205 = por %p203, %p204
      %p206 = scmp.ne.s32.totalorder %s197, %s198
      %p207 = scmp.eq.s32.totalorder %s30, 0
      %p208 = por %p206, %p207
      %p209 = scmp.ne.s32.totalorder %s197, %s198
      %p210 = scmp.eq.s32.totalorder %s31, 1
      %p211 = por %p209, %p210
      %p213 = scmp.ne.s32.totalorder %s198, %s212
      %p214 = scmp.eq.s32.totalorder %s31, 0
      %p215 = por %p213, %p214
      %s217 = sadd.s32 %s216, 1
      %p220 = scmp.eq.s32.totalorder %s25, 1
      %p221 = scmp.ne.s32.totalorder %s216, %s218
      %p222 = scmp.eq.s32.totalorder %s25, 0
      %p223 = por %p221, %p222
      %p224 = scmp.ne.s32.totalorder %s216, %s218
      %p225 = scmp.eq.s32.totalorder %s30, 1
      %p226 = por %p224, %p225
      %p227 = scmp.ne.s32.totalorder %s218, %s219
      %p228 = scmp.eq.s32.totalorder %s30, 0
      %p229 = por %p227, %p228
      %p230 = scmp.ne.s32.totalorder %s218, %s219
      %p231 = scmp.eq.s32.totalorder %s31, 1
      %p232 = por %p230, %p231
      %p234 = scmp.ne.s32.totalorder %s219, %s233
      %p235 = scmp.eq.s32.totalorder %s31, 0
      %p236 = por %p234, %p235
      %s238 = sadd.s32 %s237, 1
      %p241 = scmp.eq.s32.totalorder %s25, 1
      %p242 = scmp.ne.s32.totalorder %s237, %s239
      %p243 = scmp.eq.s32.totalorder %s25, 0
      %p244 = por %p242, %p243
      %p245 = scmp.ne.s32.totalorder %s237, %s239
      %p246 = scmp.eq.s32.totalorder %s30, 1
      %p247 = por %p245, %p246
      %p248 = scmp.ne.s32.totalorder %s239, %s240
      %p249 = scmp.eq.s32.totalorder %s30, 0
      %p250 = por %p248, %p249
      %p251 = scmp.ne.s32.totalorder %s239, %s240
      %p252 = scmp.eq.s32.totalorder %s31, 1
      %p253 = por %p251, %p252
      %p255 = scmp.ne.s32.totalorder %s240, %s254
      %p256 = scmp.eq.s32.totalorder %s31, 0
      %p257 = por %p255, %p256
      %s259 = sadd.s32 %s258, 1
      %p262 = scmp.eq.s32.totalorder %s25, 1
      %p263 = scmp.ne.s32.totalorder %s258, %s260
      %p264 = scmp.eq.s32.totalorder %s25, 0
      %p265 = por %p263, %p264
      %p266 = scmp.ne.s32.totalorder %s258, %s260
      %p267 = scmp.eq.s32.totalorder %s30, 1
      %p268 = por %p266, %p267
      %p269 = scmp.ne.s32.totalorder %s260, %s261
      %p270 = scmp.eq.s32.totalorder %s30, 0
      %p271 = por %p269, %p270
      %p272 = scmp.ne.s32.totalorder %s260, %s261
      %p273 = scmp.eq.s32.totalorder %s31, 1
      %p274 = por %p272, %p273
      %p276 = scmp.ne.s32.totalorder %s261, %s275
      %p277 = scmp.eq.s32.totalorder %s31, 0
      %p278 = por %p276, %p277
      %s279 = ssub.s32 %s25, %s32
      %p280 = scmp.eq.s32.totalorder %s279, 0
      %s282 = sadd.s32 %s281, 1
      %s283 = scalar_select %p280, %s281, %s282
      %p286 = pneg %p280
      %p287 = scmp.eq.s32.totalorder %s25, 1
      %p288 = por %p286, %p287
      %p289 = scmp.ne.s32.totalorder %s281, %s284
      %p290 = scmp.eq.s32.totalorder %s25, 0
      %p291 = por %p289, %p290
      %p292 = scmp.ne.s32.totalorder %s281, %s284
      %p293 = scmp.eq.s32.totalorder %s30, 1
      %p294 = por %p292, %p293
      %p295 = scmp.ne.s32.totalorder %s284, %s285
      %p296 = scmp.eq.s32.totalorder %s30, 0
      %p297 = por %p295, %p296
      %p298 = scmp.ne.s32.totalorder %s284, %s285
      %p299 = scmp.eq.s32.totalorder %s31, 1
      %p300 = por %p298, %p299
      %p302 = scmp.ne.s32.totalorder %s285, %s301
      %p303 = scmp.eq.s32.totalorder %s31, 0
      %p304 = por %p302, %p303
      %s305 = ssub.s32 %s25, %s32
      %p306 = scmp.eq.s32.totalorder %s305, 0
      %s308 = sadd.s32 %s307, 1
      %s309 = scalar_select %p306, %s307, %s308
      %p312 = pneg %p306
      %p313 = scmp.eq.s32.totalorder %s25, 1
      %p314 = por %p312, %p313
      %p315 = scmp.ne.s32.totalorder %s307, %s310
      %p316 = scmp.eq.s32.totalorder %s25, 0
      %p317 = por %p315, %p316
      %p318 = scmp.ne.s32.totalorder %s307, %s310
      %p319 = scmp.eq.s32.totalorder %s30, 1
      %p320 = por %p318, %p319
      %p321 = scmp.ne.s32.totalorder %s310, %s311
      %p322 = scmp.eq.s32.totalorder %s30, 0
      %p323 = por %p321, %p322
      %p324 = scmp.ne.s32.totalorder %s310, %s311
      %p325 = scmp.eq.s32.totalorder %s31, 1
      %p326 = por %p324, %p325
      %p328 = scmp.ne.s32.totalorder %s311, %s327
      %p329 = scmp.eq.s32.totalorder %s31, 0
      %p330 = por %p328, %p329
      %p331 = scmp.le.s32.totalorder 1, %s25
      %p332 = scmp.lt.s32.totalorder %s25, 3
      %p333 = pnand %p331, %p332
      %p334 = pneg %p333
      // Predicated region
      $region9: #{tpu_custom_call.1} parent=5 // pred_check
        _
      $region10: #{tpu_custom_call.1} parent=5 // pred_check_branch
        %336 = sbr.rel (%p333) target = $region12
      $region11: #{tpu_custom_call.1} parent=5 // pred_region
        %s337 = ssub.s32 %s25, 1
        // Predicated region
        $region13: #{tpu_custom_call.1} parent=11 // pred_check
          %p338 = pneg %p124
        $region14: #{tpu_custom_call.1} parent=11 // pred_check_branch
          %340 = sbr.rel (%p338) target = $region16
        $region15: #{tpu_custom_call.1} parent=11 // pred_region
          _
        $region16: #{tpu_custom_call.1} parent=11 // pred_fallthru
          _
        // Predicated region
        $region17: #{tpu_custom_call.1} parent=11 // pred_check
          %p341 = pneg %p145
        $region18: #{tpu_custom_call.1} parent=11 // pred_check_branch
          %343 = sbr.rel (%p341) target = $region20
        $region19: #{tpu_custom_call.1} parent=11 // pred_region
          _
        $region20: #{tpu_custom_call.1} parent=11 // pred_fallthru
          _
        // Predicated region
        $region21: #{tpu_custom_call.1} parent=11 // pred_check
          %p344 = pneg %p166
        $region22: #{tpu_custom_call.1} parent=11 // pred_check_branch
          %346 = sbr.rel (%p344) target = $region24
        $region23: #{tpu_custom_call.1} parent=11 // pred_region
          _
        $region24: #{tpu_custom_call.1} parent=11 // pred_fallthru
          _
        // Predicated region
        $region25: #{tpu_custom_call.1} parent=11 // pred_check
          %p347 = pneg %p187
        $region26: #{tpu_custom_call.1} parent=11 // pred_check_branch
          %349 = sbr.rel (%p347) target = $region28
        $region27: #{tpu_custom_call.1} parent=11 // pred_region
          _
        $region28: #{tpu_custom_call.1} parent=11 // pred_fallthru
          _
        // Predicated region
        $region29: #{tpu_custom_call.1} parent=11 // pred_check
          %p350 = pneg %p208
        $region30: #{tpu_custom_call.1} parent=11 // pred_check_branch
          %352 = sbr.rel (%p350) target = $region32
        $region31: #{tpu_custom_call.1} parent=11 // pred_region
          _
        $region32: #{tpu_custom_call.1} parent=11 // pred_fallthru
          _
        // Predicated region
        $region33: #{tpu_custom_call.1} parent=11 // pred_check
          %p353 = pneg %p229
        $region34: #{tpu_custom_call.1} parent=11 // pred_check_branch
          %355 = sbr.rel (%p353) target = $region36
        $region35: #{tpu_custom_call.1} parent=11 // pred_region
          _
        $region36: #{tpu_custom_call.1} parent=11 // pred_fallthru
          _
        // Predicated region
        $region37: #{tpu_custom_call.1} parent=11 // pred_check
          %p356 = pneg %p250
        $region38: #{tpu_custom_call.1} parent=11 // pred_check_branch
          %358 = sbr.rel (%p356) target = $region40
        $region39: #{tpu_custom_call.1} parent=11 // pred_region
          _
        $region40: #{tpu_custom_call.1} parent=11 // pred_fallthru
          _
        // Predicated region
        $region41: #{tpu_custom_call.1} parent=11 // pred_check
          %p359 = pneg %p271
        $region42: #{tpu_custom_call.1} parent=11 // pred_check_branch
          %361 = sbr.rel (%p359) target = $region44
        $region43: #{tpu_custom_call.1} parent=11 // pred_region
          _
        $region44: #{tpu_custom_call.1} parent=11 // pred_fallthru
          _
      $region12: #{tpu_custom_call.1} parent=5 // pred_fallthru
        _
      %p362 = scmp.lt.s32.totalorder %s25, 2
      // Predicated region
      $region45: #{tpu_custom_call.1} parent=5 // pred_check
        %p363 = pneg %p362
      $region46: #{tpu_custom_call.1} parent=5 // pred_check_branch
        %365 = sbr.rel (%p363) target = $region48
      $region47: #{tpu_custom_call.1} parent=5 // pred_region
        // Predicated region
        $region49: #{tpu_custom_call.1} parent=47 // pred_check
          %p366 = pneg %p45
        $region50: #{tpu_custom_call.1} parent=47 // pred_check_branch
          %368 = sbr.rel (%p366) target = $region52
        $region51: #{tpu_custom_call.1} parent=47 // pred_region
          %s369 = smul.u32 2, %s25
          %p370 = scmp.lt.s32.totalorder %s369, 3
          %s371 = scalar_select %p370, %s369, 3
          %s372 = smul.addr %s371, 8
          %s373 = scalar_lea.vmem %s0, %s372
          %s374 = smul.u32 2, %s25
        $region52: #{tpu_custom_call.1} parent=47 // pred_fallthru
          _
        // Predicated region
        $region53: #{tpu_custom_call.1} parent=47 // pred_check
          %p375 = pneg %p71
        $region54: #{tpu_custom_call.1} parent=47 // pred_check_branch
          %377 = sbr.rel (%p375) target = $region56
        $region55: #{tpu_custom_call.1} parent=47 // pred_region
          %s378 = smul.u32 2, %s25
          %p379 = scmp.lt.s32.totalorder %s378, 3
          %s380 = scalar_select %p379, %s378, 3
          %s381 = smul.addr %s380, 8
          %s382 = scalar_lea.vmem %s1, %s381
          %s383 = smul.u32 2, %s25
        $region56: #{tpu_custom_call.1} parent=47 // pred_fallthru
          _
        // Predicated region
        $region57: #{tpu_custom_call.1} parent=47 // pred_check
          %p384 = pneg %p97
        $region58: #{tpu_custom_call.1} parent=47 // pred_check_branch
          %386 = sbr.rel (%p384) target = $region60
        $region59: #{tpu_custom_call.1} parent=47 // pred_region
          %s387 = smul.u32 2, %s25
          %p388 = scmp.lt.s32.totalorder %s387, 3
          %s389 = scalar_select %p388, %s387, 3
          %s390 = smul.addr %s389, 8
          %s391 = scalar_lea.vmem %s2, %s390
          %s392 = smul.u32 2, %s25
        $region60: #{tpu_custom_call.1} parent=47 // pred_fallthru
          _
      $region48: #{tpu_custom_call.1} parent=5 // pred_fallthru
        _
      %p393 = scmp.le.s32.totalorder 1, %s25
      %p394 = scmp.lt.s32.totalorder %s25, 3
      %p395 = pnand %p393, %p394
      %p396 = pneg %p395
      // Predicated region
      $region61: #{tpu_custom_call.1} parent=5 // pred_check
        _
      $region62: #{tpu_custom_call.1} parent=5 // pred_check_branch
        %398 = sbr.rel (%p395) target = $region64
      $region63: #{tpu_custom_call.1} parent=5 // pred_region
        %s399 = ssub.s32 %s25, 1
        %s400 = smul.u32 2, %s30
        %p401 = scmp.lt.s32.totalorder %s400, 3
        %s402 = scalar_select %p401, %s400, 3
        %s403 = smul.addr %s402, 8
        %s404 = scalar_lea.vmem %s0, %s403
        %p405 = pneg %p51
        %p406 = pneg %p48
        %s407 = smul.u32 2, %s30
        %p408 = scmp.lt.s32.totalorder %s407, 3
        %s409 = scalar_select %p408, %s407, 3
        %s410 = smul.addr %s409, 8
        %s411 = scalar_lea.vmem %s1, %s410
        %p412 = pneg %p77
        %p413 = pneg %p74
        %s414 = smul.u32 2, %s30
        %p415 = scmp.lt.s32.totalorder %s414, 3
        %s416 = scalar_select %p415, %s414, 3
        %s417 = smul.addr %s416, 8
        %s418 = scalar_lea.vmem %s2, %s417
        %p419 = pneg %p103
        %p420 = pneg %p100
        %p421 = pneg %p124
        %p422 = pneg %p121
        %p423 = pneg %p145
        %p424 = pneg %p142
        %p425 = pneg %p166
        %p426 = pneg %p163
        %p427 = pneg %p187
        %p428 = pneg %p184
        %p429 = pneg %p208
        %p430 = pneg %p205
        %p431 = pneg %p229
        %p432 = pneg %p226
        %p433 = pneg %p250
        %p434 = pneg %p247
        %p435 = pneg %p271
        %p436 = pneg %p268
        %p437 = pneg %p297
        %p438 = pneg %p294
        %s439 = sand.u32 %s284, 1
        %s440 = scalar_lea.sflag [#allocation3], %s439
        %s441 = sand.u32 %s284, 1
        %s442 = smul.addr %s441, 16
        %s443 = scalar_lea.vmem [#allocation2], %s442
        %p444 = pneg %p323
        %p445 = pneg %p320
        %s446 = sand.u32 %s310, 1
        %s447 = scalar_lea.sflag [#allocation5], %s446
        %s448 = sand.u32 %s310, 1
        %s449 = smul.addr %s448, 8
        %s450 = scalar_lea.vmem [#allocation4], %s449
        %s451 = smul.u32 2, %s30
        %p452 = scmp.lt.s32.totalorder %s451, 3
        %s453 = scalar_select %p452, %s451, 3
        %s454 = smul.addr %s453, 8
        %s455 = scalar_lea.vmem %s0, %s454
        %s456 = smul.u32 2, %s30
        %s457 = smul.u32 2, %s30
        %p458 = scmp.lt.s32.totalorder %s457, 3
        %s459 = scalar_select %p458, %s457, 3
        %s460 = smul.addr %s459, 8
        %s461 = scalar_lea.vmem %s1, %s460
        %s462 = smul.u32 2, %s30
        %s463 = smul.u32 2, %s30
        %p464 = scmp.lt.s32.totalorder %s463, 3
        %s465 = scalar_select %p464, %s463, 3
        %s466 = smul.addr %s465, 8
        %s467 = scalar_lea.vmem %s2, %s466
        %s468 = smul.u32 2, %s30
        %s469 = smul.u32 2, %s30
        %s470 = smul.u32 2, %s30
        %v471 = vld [vmem:[%s455] sm:$0xff]
        %v472 = vld [vmem:[%s455 + $0x8] sm:$0xff]
        %v473 = vld [vmem:[%s467] sm:$0xff]
        %v474 = vld [vmem:[%s467 + $0x8] sm:$0xff]
        %v475 = vld [vmem:[%s3] sm:$0x1]
        %477 = vset.pattern.permute.xlu0 0
        %478 = vperm.xlu0 %477, %v473
        %v479 = vpop.permute.xlu0 %478
        %482 = vset.pattern.permute.xlu0 0
        %483 = vperm.xlu0 %482, %v474
        %v484 = vpop.permute.xlu0 %483
        %v487 = vlaneseq
        %v488 = vshrl.u32 %v487, 7
        %v489 = vsub.s32 0, %v488
        %v490 = vrot.slane %v475, %v489
        %v492 = vmul.f32 %v479, %v490
        %v493 = vmul.f32 %v484, %v490
        %v494 = vadd.f32 %v471, %v492
        %v495 = vadd.f32 %v472, %v493
        %v496 = vld [vmem:[%s4] sm:$0xff]
        %v497 = vld [vmem:[%s4 + $0x8] sm:$0xff]
        %v498 = vld [vmem:[%s4 + $0x10] sm:$0xff]
        %v499 = vld [vmem:[%s4 + $0x18] sm:$0xff]
        %v500 = vld [vmem:[%s5] sm:$0x1]
        %v502 = vlaneseq
        %v503 = vshrl.u32 %v502, 7
        %v504 = vsub.s32 0, %v503
        %v505 = vrot.slane %v500, %v504
        %vm507 = vcmask 261120
        %v509 = vsel %vm507, %v494, 0
        %v512 = vsel %vm507, %v495, 0
        %514 = vmatprep.subr.mxu0 0.0
        %515 = vmatpush1.msra.mxu0 %v496
        %516 = vmatprep.subr.mxu0 0.0
        %517 = vmatpush1.msra.mxu0 %v497
        %518 = vmatprep.subr.mxu0 0.0
        %519 = vmatpush1.msra.mxu0 %v498
        %520 = vmatprep.subr.mxu0 0.0
        %521 = vmatpush1.msra.mxu0 %v499
        %522 = vmatprep.subr.mxu0 0.0
        %523 = vmatpush1.msra.mxu0 0.0
        %524 = vmatprep.subr.mxu0 0.0
        %525 = vmatpush1.msra.mxu0 0.0
        %526 = vmatprep.subr.mxu0 0.0
        %527 = vmatpush1.msra.mxu0 0.0
        %528 = vmatprep.subr.mxu0 0.0
        %529 = vmatpush1.msra.mxu0 0.0
        %530 = vmatprep.subr.mxu0 0.0
        %531 = vmatpush1.msra.mxu0 0.0
        %532 = vmatprep.subr.mxu0 0.0
        %533 = vmatpush1.msra.mxu0 0.0
        %534 = vmatprep.subr.mxu0 0.0
        %535 = vmatpush1.msra.mxu0 0.0
        %536 = vmatprep.subr.mxu0 0.0
        %537 = vmatpush1.msra.mxu0 0.0
        %538 = vmatprep.subr.mxu0 0.0
        %539 = vmatpush1.msra.mxu0 0.0
        %540 = vmatprep.subr.mxu0 0.0
        %541 = vmatpush1.msra.mxu0 0.0
        %542 = vmatprep.subr.mxu0 0.0
        %543 = vmatpush1.msra.mxu0 0.0
        %544 = vmatprep.subr.mxu0 0.0
        %545 = vmatpush1.msra.mxu0 0.0
        %546 = vmatprep.subr.mxu0 0.0
        %547 = vmatpush1.msra.mxu0 0.0
        %548 = vmatprep.subr.mxu0 0.0
        %549 = vmatpush1.msra.mxu0 0.0
        %550 = vmatprep.subr.mxu0 0.0
        %551 = vmatpush1.msra.mxu0 0.0
        %552 = vmatprep.subr.mxu0 0.0
        %553 = vmatpush1.msra.mxu0 0.0
        %554 = vmatprep.subr.mxu0 0.0
        %555 = vmatpush1.msra.mxu0 0.0
        %556 = vmatprep.subr.mxu0 0.0
        %557 = vmatpush1.msra.mxu0 0.0
        %558 = vmatprep.subr.mxu0 0.0
        %559 = vmatpush1.msra.mxu0 0.0
        %560 = vmatprep.subr.mxu0 0.0
        %561 = vmatpush1.msra.mxu0 0.0
        %562 = vmatprep.subr.mxu0 0.0
        %563 = vmatpush1.msra.mxu0 0.0
        %564 = vmatprep.subr.mxu0 0.0
        %565 = vmatpush1.msra.mxu0 0.0
        %566 = vmatprep.subr.mxu0 0.0
        %567 = vmatpush1.msra.mxu0 0.0
        %568 = vmatprep.subr.mxu0 0.0
        %569 = vmatpush1.msra.mxu0 0.0
        %570 = vmatprep.subr.mxu0 0.0
        %571 = vmatpush1.msra.mxu0 0.0
        %572 = vmatprep.subr.mxu0 0.0
        %573 = vmatpush1.msra.mxu0 0.0
        %574 = vmatprep.subr.mxu0 0.0
        %575 = vmatpush1.msra.mxu0 0.0
        %576 = vmatprep.subr.mxu0 0.0
        %577 = vmatpush1.msra.mxu0 0.0
        %578 = vmatprep.mubr.f32.mxu0 0.0
        %579 = vmatmul.mubr.f32.gmra.mrb[0].mxu0 %v509
        %v580 = vpop.f32.mrb[0].mxu0
        %v581 = vadd.f32 %v505, %v580
        %v582 = vpop.f32.mrb[0].mxu0
        %583 = vmatprep.mubr.f32.mxu0 0.0
        %584 = vmatmul.mubr.f32.gmra.mrb[0].mxu0 %v512
        %v585 = vpop.f32.mrb[0].mxu0
        %v586 = vadd.f32 %v505, %v585
        %v587 = vpop.f32.mrb[0].mxu0
        %588 = vdwg.mxu0
        %vm589 = vcmp.gt.f32.partialorder %v581, 0.0
        %vm590 = vcmp.gt.f32.partialorder %v586, 0.0
        %v591 = vmin.f32 %v581, 0.0
        %v592 = vmin.f32 %v586, 0.0
        %v593 = vmul.f32 %v591, 1.442695
        %v594 = vpow.pop %v593
        %v595 = vmul.f32 %v592, 1.442695
        %v596 = vpow.pop %v595
        %v597 = vsub.f32 %v594, 1.0
        %v598 = vsub.f32 %v596, 1.0
        %v599 = vsel %vm589, %v581, %v597
        %v600 = vsel %vm590, %v586, %v598
        %v601 = vld [vmem:[%s6] sm:$0xff]
        %v602 = vld [vmem:[%s6 + $0x8] sm:$0xff]
        %v603 = vld [vmem:[%s6 + $0x10] sm:$0xff]
        %v604 = vld [vmem:[%s6 + $0x18] sm:$0xff]
        %v605 = vld [vmem:[%s6 + $0x20] sm:$0xff]
        %v606 = vld [vmem:[%s6 + $0x28] sm:$0xff]
        %v607 = vld [vmem:[%s6 + $0x30] sm:$0xff]
        %v608 = vld [vmem:[%s6 + $0x38] sm:$0xff]
        %v609 = vld [vmem:[%s7] sm:$0x1]
        %v611 = vlaneseq
        %v612 = vshrl.u32 %v611, 7
        %v613 = vsub.s32 0, %v612
        %v614 = vrot.slane %v609, %v613
        %vm616 = vcmask 523264
        %v618 = vsel %vm616, %v599, 0
        %v621 = vsel %vm616, %v600, 0
        %623 = vmatprep.subr.mxu0 0.0
        %624 = vmatpush1.msra.mxu0 %v601
        %625 = vmatprep.subr.mxu0 0.0
        %626 = vmatpush1.msra.mxu0 %v602
        %627 = vmatprep.subr.mxu0 0.0
        %628 = vmatpush1.msra.mxu0 %v603
        %629 = vmatprep.subr.mxu0 0.0
        %630 = vmatpush1.msra.mxu0 %v604
        %631 = vmatprep.subr.mxu0 0.0
        %632 = vmatpush1.msra.mxu0 %v605
        %633 = vmatprep.subr.mxu0 0.0
        %634 = vmatpush1.msra.mxu0 %v606
        %635 = vmatprep.subr.mxu0 0.0
        %636 = vmatpush1.msra.mxu0 %v607
        %637 = vmatprep.subr.mxu0 0.0
        %638 = vmatpush1.msra.mxu0 %v608
        %639 = vmatprep.subr.mxu0 0.0
        %640 = vmatpush1.msra.mxu0 0.0
        %641 = vmatprep.subr.mxu0 0.0
        %642 = vmatpush1.msra.mxu0 0.0
        %643 = vmatprep.subr.mxu0 0.0
        %644 = vmatpush1.msra.mxu0 0.0
        %645 = vmatprep.subr.mxu0 0.0
        %646 = vmatpush1.msra.mxu0 0.0
        %647 = vmatprep.subr.mxu0 0.0
        %648 = vmatpush1.msra.mxu0 0.0
        %649 = vmatprep.subr.mxu0 0.0
        %650 = vmatpush1.msra.mxu0 0.0
        %651 = vmatprep.subr.mxu0 0.0
        %652 = vmatpush1.msra.mxu0 0.0
        %653 = vmatprep.subr.mxu0 0.0
        %654 = vmatpush1.msra.mxu0 0.0
        %655 = vmatprep.subr.mxu0 0.0
        %656 = vmatpush1.msra.mxu0 0.0
        %657 = vmatprep.subr.mxu0 0.0
        %658 = vmatpush1.msra.mxu0 0.0
        %659 = vmatprep.subr.mxu0 0.0
        %660 = vmatpush1.msra.mxu0 0.0
        %661 = vmatprep.subr.mxu0 0.0
        %662 = vmatpush1.msra.mxu0 0.0
        %663 = vmatprep.subr.mxu0 0.0
        %664 = vmatpush1.msra.mxu0 0.0
        %665 = vmatprep.subr.mxu0 0.0
        %666 = vmatpush1.msra.mxu0 0.0
        %667 = vmatprep.subr.mxu0 0.0
        %668 = vmatpush1.msra.mxu0 0.0
        %669 = vmatprep.subr.mxu0 0.0
        %670 = vmatpush1.msra.mxu0 0.0
        %671 = vmatprep.subr.mxu0 0.0
        %672 = vmatpush1.msra.mxu0 0.0
        %673 = vmatprep.subr.mxu0 0.0
        %674 = vmatpush1.msra.mxu0 0.0
        %675 = vmatprep.subr.mxu0 0.0
        %676 = vmatpush1.msra.mxu0 0.0
        %677 = vmatprep.subr.mxu0 0.0
        %678 = vmatpush1.msra.mxu0 0.0
        %679 = vmatprep.subr.mxu0 0.0
        %680 = vmatpush1.msra.mxu0 0.0
        %681 = vmatprep.subr.mxu0 0.0
        %682 = vmatpush1.msra.mxu0 0.0
        %683 = vmatprep.subr.mxu0 0.0
        %684 = vmatpush1.msra.mxu0 0.0
        %685 = vmatprep.subr.mxu0 0.0
        %686 = vmatpush1.msra.mxu0 0.0
        %687 = vmatprep.mubr.f32.mxu0 0.0
        %688 = vmatmul.mubr.f32.gmra.mrb[0].mxu0 %v618
        %v689 = vpop.f32.mrb[0].mxu0
        %v690 = vadd.f32 %v614, %v689
        %v691 = vpop.f32.mrb[0].mxu0
        %692 = vmatprep.mubr.f32.mxu0 0.0
        %693 = vmatmul.mubr.f32.gmra.mrb[0].mxu0 %v621
        %v694 = vpop.f32.mrb[0].mxu0
        %v695 = vadd.f32 %v614, %v694
        %v696 = vpop.f32.mrb[0].mxu0
        %697 = vdwg.mxu0
        %vm698 = vcmp.gt.f32.partialorder %v690, 0.0
        %vm699 = vcmp.gt.f32.partialorder %v695, 0.0
        %v700 = vmin.f32 %v690, 0.0
        %v701 = vmin.f32 %v695, 0.0
        %v702 = vmul.f32 %v700, 1.442695
        %v703 = vpow.pop %v702
        %v704 = vmul.f32 %v701, 1.442695
        %v705 = vpow.pop %v704
        %v706 = vsub.f32 %v703, 1.0
        %v707 = vsub.f32 %v705, 1.0
        %v708 = vsel %vm698, %v690, %v706
        %v709 = vsel %vm699, %v695, %v707
        %v710 = vld [vmem:[%s8] sm:$0xff]
        %v711 = vld [vmem:[%s8 + $0x8] sm:$0xff]
        %vm712 = vcmask 130048
        %v714 = vsel %vm712, %v708, 0
        %v717 = vsel %vm712, %v709, 0
        %719 = vmatprep.subr.mxu0 0.0
        %720 = vmatpush1.msra.mxu0 %v710
        %721 = vmatprep.subr.mxu0 0.0
        %722 = vmatpush1.msra.mxu0 %v711
        %723 = vmatprep.subr.mxu0 0.0
        %724 = vmatpush1.msra.mxu0 0.0
        %725 = vmatprep.subr.mxu0 0.0
        %726 = vmatpush1.msra.mxu0 0.0
        %727 = vmatprep.subr.mxu0 0.0
        %728 = vmatpush1.msra.mxu0 0.0
        %729 = vmatprep.subr.mxu0 0.0
        %730 = vmatpush1.msra.mxu0 0.0
        %731 = vmatprep.subr.mxu0 0.0
        %732 = vmatpush1.msra.mxu0 0.0
        %733 = vmatprep.subr.mxu0 0.0
        %734 = vmatpush1.msra.mxu0 0.0
        %735 = vmatprep.subr.mxu0 0.0
        %736 = vmatpush1.msra.mxu0 0.0
        %737 = vmatprep.subr.mxu0 0.0
        %738 = vmatpush1.msra.mxu0 0.0
        %739 = vmatprep.subr.mxu0 0.0
        %740 = vmatpush1.msra.mxu0 0.0
        %741 = vmatprep.subr.mxu0 0.0
        %742 = vmatpush1.msra.mxu0 0.0
        %743 = vmatprep.subr.mxu0 0.0
        %744 = vmatpush1.msra.mxu0 0.0
        %745 = vmatprep.subr.mxu0 0.0
        %746 = vmatpush1.msra.mxu0 0.0
        %747 = vmatprep.subr.mxu0 0.0
        %748 = vmatpush1.msra.mxu0 0.0
        %749 = vmatprep.subr.mxu0 0.0
        %750 = vmatpush1.msra.mxu0 0.0
        %751 = vmatprep.subr.mxu0 0.0
        %752 = vmatpush1.msra.mxu0 0.0
        %753 = vmatprep.subr.mxu0 0.0
        %754 = vmatpush1.msra.mxu0 0.0
        %755 = vmatprep.subr.mxu0 0.0
        %756 = vmatpush1.msra.mxu0 0.0
        %757 = vmatprep.subr.mxu0 0.0
        %758 = vmatpush1.msra.mxu0 0.0
        %759 = vmatprep.subr.mxu0 0.0
        %760 = vmatpush1.msra.mxu0 0.0
        %761 = vmatprep.subr.mxu0 0.0
        %762 = vmatpush1.msra.mxu0 0.0
        %763 = vmatprep.subr.mxu0 0.0
        %764 = vmatpush1.msra.mxu0 0.0
        %765 = vmatprep.subr.mxu0 0.0
        %766 = vmatpush1.msra.mxu0 0.0
        %767 = vmatprep.subr.mxu0 0.0
        %768 = vmatpush1.msra.mxu0 0.0
        %769 = vmatprep.subr.mxu0 0.0
        %770 = vmatpush1.msra.mxu0 0.0
        %771 = vmatprep.subr.mxu0 0.0
        %772 = vmatpush1.msra.mxu0 0.0
        %773 = vmatprep.subr.mxu0 0.0
        %774 = vmatpush1.msra.mxu0 0.0
        %775 = vmatprep.subr.mxu0 0.0
        %776 = vmatpush1.msra.mxu0 0.0
        %777 = vmatprep.subr.mxu0 0.0
        %778 = vmatpush1.msra.mxu0 0.0
        %779 = vmatprep.subr.mxu0 0.0
        %780 = vmatpush1.msra.mxu0 0.0
        %781 = vmatprep.subr.mxu0 0.0
        %782 = vmatpush1.msra.mxu0 0.0
        %783 = vmatprep.mubr.f32.mxu0 0.0
        %784 = vmatmul.mubr.f32.gmra.mrb[0].mxu0 %v714
        %v785 = vpop.f32.mrb[0].mxu0
        %v786 = vadd.f32 0.0, %v785
        %v787 = vpop.f32.mrb[0].mxu0
        %788 = vmatprep.mubr.f32.mxu0 0.0
        %789 = vmatmul.mubr.f32.gmra.mrb[0].mxu0 %v717
        %v790 = vpop.f32.mrb[0].mxu0
        %v791 = vadd.f32 0.0, %v790
        %v792 = vpop.f32.mrb[0].mxu0
        %793 = vdwg.mxu0
        %v794 = vpack.c.bf16 %v791, %v786
        %v796 = vunpack.c.l.b16 %v794
        %v797 = vunpack.c.h.b16 %v794
        %v798 = vpack.c.b16 %v796, %v796
        %v799 = vpack.c.b16 %v797, %v797
        %vm802 = vcmask 519168
        %803 = vst.msk [vmem:[%s450] sm:$0xf] %vm802, %v798
        %804 = vst.msk [vmem:[%s450 + $0x4] sm:$0xf] %vm802, %v799
        %v805 = vld [vmem:[%s461] sm:$0xff]
        %v806 = vld [vmem:[%s461 + $0x8] sm:$0xff]
        %v807 = vld [vmem:[%s9] sm:$0xff]
        %v808 = vld [vmem:[%s9 + $0x8] sm:$0xff]
        %v809 = vld [vmem:[%s9 + $0x10] sm:$0xff]
        %v810 = vld [vmem:[%s10] sm:$0x1]
        %v812 = vlaneseq
        %v813 = vshrl.u32 %v812, 7
        %v814 = vsub.s32 0, %v813
        %v815 = vrot.slane %v810, %v814
        %vm817 = vcmask 195584
        %v819 = vsel %vm817, %v805, 0
        %v822 = vsel %vm817, %v806, 0
        %824 = vmatprep.subr.mxu0 0.0
        %825 = vmatpush1.msra.mxu0 %v807
        %826 = vmatprep.subr.mxu0 0.0
        %827 = vmatpush1.msra.mxu0 %v808
        %828 = vmatprep.subr.mxu0 0.0
        %829 = vmatpush1.msra.mxu0 %v809
        %830 = vmatprep.subr.mxu0 0.0
        %831 = vmatpush1.msra.mxu0 0.0
        %832 = vmatprep.subr.mxu0 0.0
        %833 = vmatpush1.msra.mxu0 0.0
        %834 = vmatprep.subr.mxu0 0.0
        %835 = vmatpush1.msra.mxu0 0.0
        %836 = vmatprep.subr.mxu0 0.0
        %837 = vmatpush1.msra.mxu0 0.0
        %838 = vmatprep.subr.mxu0 0.0
        %839 = vmatpush1.msra.mxu0 0.0
        %840 = vmatprep.subr.mxu0 0.0
        %841 = vmatpush1.msra.mxu0 0.0
        %842 = vmatprep.subr.mxu0 0.0
        %843 = vmatpush1.msra.mxu0 0.0
        %844 = vmatprep.subr.mxu0 0.0
        %845 = vmatpush1.msra.mxu0 0.0
        %846 = vmatprep.subr.mxu0 0.0
        %847 = vmatpush1.msra.mxu0 0.0
        %848 = vmatprep.subr.mxu0 0.0
        %849 = vmatpush1.msra.mxu0 0.0
        %850 = vmatprep.subr.mxu0 0.0
        %851 = vmatpush1.msra.mxu0 0.0
        %852 = vmatprep.subr.mxu0 0.0
        %853 = vmatpush1.msra.mxu0 0.0
        %854 = vmatprep.subr.mxu0 0.0
        %855 = vmatpush1.msra.mxu0 0.0
        %856 = vmatprep.subr.mxu0 0.0
        %857 = vmatpush1.msra.mxu0 0.0
        %858 = vmatprep.subr.mxu0 0.0
        %859 = vmatpush1.msra.mxu0 0.0
        %860 = vmatprep.subr.mxu0 0.0
        %861 = vmatpush1.msra.mxu0 0.0
        %862 = vmatprep.subr.mxu0 0.0
        %863 = vmatpush1.msra.mxu0 0.0
        %864 = vmatprep.subr.mxu0 0.0
        %865 = vmatpush1.msra.mxu0 0.0
        %866 = vmatprep.subr.mxu0 0.0
        %867 = vmatpush1.msra.mxu0 0.0
        %868 = vmatprep.subr.mxu0 0.0
        %869 = vmatpush1.msra.mxu0 0.0
        %870 = vmatprep.subr.mxu0 0.0
        %871 = vmatpush1.msra.mxu0 0.0
        %872 = vmatprep.subr.mxu0 0.0
        %873 = vmatpush1.msra.mxu0 0.0
        %874 = vmatprep.subr.mxu0 0.0
        %875 = vmatpush1.msra.mxu0 0.0
        %876 = vmatprep.subr.mxu0 0.0
        %877 = vmatpush1.msra.mxu0 0.0
        %878 = vmatprep.subr.mxu0 0.0
        %879 = vmatpush1.msra.mxu0 0.0
        %880 = vmatprep.subr.mxu0 0.0
        %881 = vmatpush1.msra.mxu0 0.0
        %882 = vmatprep.subr.mxu0 0.0
        %883 = vmatpush1.msra.mxu0 0.0
        %884 = vmatprep.subr.mxu0 0.0
        %885 = vmatpush1.msra.mxu0 0.0
        %886 = vmatprep.subr.mxu0 0.0
        %887 = vmatpush1.msra.mxu0 0.0
        %888 = vmatprep.mubr.f32.mxu0 0.0
        %889 = vmatmul.mubr.f32.gmra.mrb[0].mxu0 %v819
        %v890 = vpop.f32.mrb[0].mxu0
        %v891 = vadd.f32 %v815, %v890
        %v892 = vpop.f32.mrb[0].mxu0
        %893 = vmatprep.mubr.f32.mxu0 0.0
        %894 = vmatmul.mubr.f32.gmra.mrb[0].mxu0 %v822
        %v895 = vpop.f32.mrb[0].mxu0
        %v896 = vadd.f32 %v815, %v895
        %v897 = vpop.f32.mrb[0].mxu0
        %898 = vdwg.mxu0
        %899 = vrot.lane.b32.xlu0 %v708, 32
        %v900 = vpop.permute.xlu0 %899
        %901 = vrot.lane.b32.xlu0 %v709, 32
        %v902 = vpop.permute.xlu0 %901
        %907 = vrot.lane.b32.xlu0 %v891, 48
        %v908 = vpop.permute.xlu0 %907
        %909 = vrot.lane.b32.xlu0 %v896, 48
        %v910 = vpop.permute.xlu0 %909
        %v913 = vsel %vm507, %v494, %v900
        %v914 = vsel %vm507, %v495, %v902
        %vm915 = vcmask 392192
        %v916 = vsel %vm915, %v913, %v908
        %v917 = vsel %vm915, %v914, %v910
        %vm918 = vcmask 654336
        %v919 = vsel %vm918, %v916, 0.0
        %v920 = vsel %vm918, %v917, 0.0
        %921 = vst [vmem:[%s443] sm:$0xff] %v919
        %922 = vst [vmem:[%s443 + $0x8] sm:$0xff] %v920
        %s923 = sand.u32 %s284, 1
        %s924 = scalar_lea.sflag [#allocation3], %s923
        %s925 = sand.u32 %s284, 1
        %s926 = smul.addr %s925, 16
        %s927 = scalar_lea.vmem [#allocation2], %s926
        %s928 = sand.u32 %s310, 1
        %s929 = scalar_lea.sflag [#allocation5], %s928
        %s930 = sand.u32 %s310, 1
        %s931 = smul.addr %s930, 8
        %s932 = scalar_lea.vmem [#allocation4], %s931
        // Predicated region
        $region65: #{tpu_custom_call.1} parent=63 // pred_check
          %p933 = pneg %p294
        $region66: #{tpu_custom_call.1} parent=63 // pred_check_branch
          %935 = sbr.rel (%p933) target = $region68
        $region67: #{tpu_custom_call.1} parent=63 // pred_region
          %s936 = smul.u32 2, %s30
          %s938 = ssub.s32 256, 256
          %939 = vsyncadd %s924, %s938
          %s940 = smul.addr %s936, 128
          %s941 = scalar_lea.hbm %s11, %s940
          %s942 = sshll.u32 %s927, 4
          %s943 = int_to_ptr.vmem [resolvable:$true] %s942
          %948 = dma.vmem_to_hbm [thread:$0]  %s943, 256, %s941, %s924, 128, 128, 8
        $region68: #{tpu_custom_call.1} parent=63 // pred_fallthru
          _
        // Predicated region
        $region69: #{tpu_custom_call.1} parent=63 // pred_check
          %p949 = pneg %p320
        $region70: #{tpu_custom_call.1} parent=63 // pred_check_branch
          %951 = sbr.rel (%p949) target = $region72
        $region71: #{tpu_custom_call.1} parent=63 // pred_region
          %s952 = smul.u32 2, %s30
          %s954 = ssub.s32 128, 128
          %955 = vsyncadd %s929, %s954
          %s956 = smul.addr %s952, 64
          %s957 = scalar_lea.hbm %s12, %s956
          %s958 = sshll.u32 %s932, 4
          %s959 = int_to_ptr.vmem [resolvable:$true] %s958
          %964 = dma.vmem_to_hbm [thread:$0]  %s959, 128, %s957, %s929, 64, 64, 4
        $region72: #{tpu_custom_call.1} parent=63 // pred_fallthru
          _
      $region64: #{tpu_custom_call.1} parent=5 // pred_fallthru
        _
      %p965 = scmp.le.s32.totalorder 2, %s25
      // Predicated region
      $region73: #{tpu_custom_call.1} parent=5 // pred_check
        %p966 = pneg %p965
      $region74: #{tpu_custom_call.1} parent=5 // pred_check_branch
        %968 = sbr.rel (%p966) target = $region76
      $region75: #{tpu_custom_call.1} parent=5 // pred_region
        %s969 = ssub.s32 %s25, 2
        // Predicated region
        $region77: #{tpu_custom_call.1} parent=75 // pred_check
          %p970 = pneg %p300
        $region78: #{tpu_custom_call.1} parent=75 // pred_check_branch
          %972 = sbr.rel (%p970) target = $region80
        $region79: #{tpu_custom_call.1} parent=75 // pred_region
          %s973 = sand.u32 %s285, 1
          %s974 = scalar_lea.sflag [#allocation3], %s973
          %s975 = sand.u32 %s285, 1
          %s976 = smul.addr %s975, 16
          %s977 = scalar_lea.vmem [#allocation2], %s976
          %978 = dma.done %s974, 256
        $region80: #{tpu_custom_call.1} parent=75 // pred_fallthru
          _
        // Predicated region
        $region81: #{tpu_custom_call.1} parent=75 // pred_check
          %p979 = pneg %p326
        $region82: #{tpu_custom_call.1} parent=75 // pred_check_branch
          %981 = sbr.rel (%p979) target = $region84
        $region83: #{tpu_custom_call.1} parent=75 // pred_region
          %s982 = sand.u32 %s311, 1
          %s983 = scalar_lea.sflag [#allocation5], %s982
          %s984 = sand.u32 %s311, 1
          %s985 = smul.addr %s984, 8
          %s986 = scalar_lea.vmem [#allocation4], %s985
          %987 = dma.done %s983, 128
        $region84: #{tpu_custom_call.1} parent=75 // pred_fallthru
          _
      $region76: #{tpu_custom_call.1} parent=5 // pred_fallthru
        _
    $region6: #{tpu_custom_call.1} parent=1 // loop_footer
      %s29 = sadd.s32 1, %s25
    $region7: #{tpu_custom_call.1} parent=1 // loop_footer_branch
      %24 = sbr.rel target = $region3
    $region8: #{tpu_custom_call.1} parent=1 // loop_exit
      _
    %988 = vsyncpa [#allocation3], 1
    %s989 = scalar_lea.sflag [#allocation3], 1
    %990 = vsyncpa %s989, 1
    %991 = vsyncpa [#allocation5], 1
    %s992 = scalar_lea.sflag [#allocation5], 1
    %993 = vsyncpa %s992, 1

</llo_original>
